<compile_context>
chip_gen: v7x
topology: tpu7x:2x2x1
jax: 0.10.0
libtpu: 0.0.40
codegen_flags: <defaults>
</compile_context>

<pallas_src>
import functools
import math

import jax
import jax.numpy as jnp
import numpy as np
from jax.experimental import pallas as pl
from jax.experimental.pallas import tpu as pltpu

EMBD_DIM = 32        # `embd_dim` constructor arg (small demo size)
TIME_STEPS = 30      # module default time_steps=30
DROPOUT_P = 0.1      # module default dropout (identity in eval mode)

LANES = 128
SUBLANES = 8
MAX_TILE_ROWS = 2048  # 2048 x 128 f32 = 1 MiB per operand block


def _round_up(n, m):
    return ((n + m - 1) // m) * m


def _layout(total_elems, max_tile_rows):
    """(rows_padded, tile_rows, num_tiles) for a lane-dense (rows, 128) slab."""
    rows = _round_up(pl.cdiv(total_elems, LANES), SUBLANES)
    if rows <= max_tile_rows:
        return rows, rows, 1
    num_tiles = pl.cdiv(rows, max_tile_rows)
    tile_rows = _round_up(pl.cdiv(rows, num_tiles), SUBLANES)
    return tile_rows * num_tiles, tile_rows, num_tiles


def make_pe_table(embd_dim, time_steps):
    """Exact replica of PostionalEcnoder.do_pos_encode (including its quirky
    2*(i+1) exponent for the cos term).  Assumes even embd_dim, like the original."""
    pe = np.zeros((time_steps, embd_dim), dtype=np.float32)
    for pos in range(time_steps):
        for i in range(0, embd_dim, 2):
            pe[pos, i] = math.sin(pos / 10000 ** (2 * i / embd_dim))
            pe[pos, i + 1] = math.cos(pos / 10000 ** (2 * (i + 1) / embd_dim))
    return pe


@functools.lru_cache(maxsize=None)
def _pe_slab(batch, time, embd_dim, time_steps, rows_padded, dtype_str):
    """Pre-tiled (over batch), flattened, zero-padded PE slab, cached on device."""
    if time > time_steps:
        raise ValueError(
            f"sequence length {time} exceeds module time_steps={time_steps}")
    pe = make_pe_table(embd_dim, time_steps)[:time]              # (T, D)
    tiled = np.tile(pe[None], (batch, 1, 1)).reshape(-1)         # (B*T*D,)
    slab = np.zeros((rows_padded * LANES,), dtype=np.float32)
    slab[: tiled.size] = tiled
    slab = slab.reshape(rows_padded, LANES).astype(np.dtype(dtype_str))
    return jnp.asarray(slab)


def pos_encode_kernel(x_ref, pe_ref, o_ref, *, scale):
    # Straight vreg-aligned FMA; x/pe/out tiles are identically shaped.
    o_ref[...] = x_ref[...] * scale + pe_ref[...]


def positional_encoder_forward(x, time_steps=TIME_STEPS,
                               max_tile_rows=MAX_TILE_ROWS):
    """x: (batch, time, embd_dim), same semantics as the PyTorch module (eval mode)."""
    B, T, D = x.shape
    total = B * T * D
    scale = float(math.sqrt(D))
    dtype_str = str(jnp.dtype(x.dtype))

    rows_padded, tile_rows, num_tiles = _layout(total, max_tile_rows)
    pe_slab = _pe_slab(B, T, D, time_steps, rows_padded, dtype_str)

    x_flat = jnp.reshape(x, (-1,))
    pad = rows_padded * LANES - total
    if pad:
        x_flat = jnp.pad(x_flat, (0, pad))
    x_slab = x_flat.reshape(rows_padded, LANES)

    itemsize = jnp.dtype(x.dtype).itemsize
    slab_elems = rows_padded * LANES
    cost = pl.CostEstimate(
        flops=2 * slab_elems,                       # one mul + one add per element
        transcendentals=0,
        bytes_accessed=3 * slab_elems * itemsize,   # x in, pe in, out
    )
    kernel = functools.partial(pos_encode_kernel, scale=scale)
    out_shape = jax.ShapeDtypeStruct((rows_padded, LANES), x.dtype)

    if num_tiles == 1:
        # Grid-less call: whole slab resident in VMEM, no grid bookkeeping.
        out_slab = pl.pallas_call(
            kernel,
            out_shape=out_shape,
            in_specs=[
                pl.BlockSpec(memory_space=pltpu.MemorySpace.VMEM),
                pl.BlockSpec(memory_space=pltpu.MemorySpace.VMEM),
            ],
            out_specs=pl.BlockSpec(memory_space=pltpu.MemorySpace.VMEM),
            input_output_aliases={0: 0},
            cost_estimate=cost,
        )(x_slab, pe_slab)
    else:
        # Row-tiled, megacore-parallel path for large B*T*D.
        out_slab = pl.pallas_call(
            kernel,
            out_shape=out_shape,
            grid=(num_tiles,),
            in_specs=[
                pl.BlockSpec((tile_rows, LANES), lambda i: (i, 0)),
                pl.BlockSpec((tile_rows, LANES), lambda i: (i, 0)),
            ],
            out_specs=pl.BlockSpec((tile_rows, LANES), lambda i: (i, 0)),
            compiler_params=pltpu.CompilerParams(
                dimension_semantics=("parallel",)),
            input_output_aliases={0: 0},
            cost_estimate=cost,
        )(x_slab, pe_slab)

    return out_slab.reshape(-1)[:total].reshape(B, T, D)


# ---------------- pure-JAX reference (correctness check) --------------------
def reference_forward(x, time_steps=TIME_STEPS):
    B, T, D = x.shape
    pe = jnp.asarray(make_pe_table(D, time_steps)[:T])
    return x * math.sqrt(D) + pe[None]


if __name__ == "__main__":
    key = jax.random.PRNGKey(0)

    test_cases = [
        (2, 8, EMBD_DIM, MAX_TILE_ROWS),   # demo shape, grid-less path
        (2, TIME_STEPS, EMBD_DIM, MAX_TILE_ROWS),  # module default T=30 (non-128 lane case)
        (4, TIME_STEPS, EMBD_DIM, 16),     # force the tiled, parallel-grid path
    ]
    for (B, T, D, tile_cap) in test_cases:
        key, sub = jax.random.split(key)
        x = jax.random.normal(sub, (B, T, D), jnp.float32)
        out = positional_encoder_forward(x, time_steps=TIME_STEPS,
                                         max_tile_rows=tile_cap)
        out = jax.block_until_ready(out)
        assert out.shape == (B, T, D)
        ref = reference_forward(x, time_steps=TIME_STEPS)
        np.testing.assert_allclose(np.asarray(out), np.asarray(ref),
                                   rtol=1e-6, atol=1e-6)

    # TODO(synk): dropout (p=0.1 in the PyTorch defaults) is implemented as
    # identity (eval-mode semantics); stochastic training-mode dropout is not
    # reproduced here.
    print("KERNEL_OK")
</pallas_src>

<mosaic_0001>
module attributes {stable_mosaic.version = 11 : i64} {
  func.func @pos_encode_kernel(%arg0: memref<8x128xf32, #tpu.memory_space<vmem>>, %arg1: memref<8x128xf32, #tpu.memory_space<vmem>>, %arg2: memref<8x128xf32, #tpu.memory_space<vmem>>) attributes {dimension_semantics = [], scalar_prefetch = 0 : i64, scratch_operands = 0 : i64, tpu.core_type = #tpu.core_type<tc>} {
    %c0 = arith.constant 0 : index
    %c0_0 = arith.constant 0 : index
    %0 = vector.load %arg0[%c0, %c0_0] : memref<8x128xf32, #tpu.memory_space<vmem>>, vector<8x128xf32>
    %cst = arith.constant 5.65685415 : f32
    %1 = vector.broadcast %cst : f32 to vector<8x128xf32>
    %2 = arith.mulf %0, %1 : vector<8x128xf32>
    %c0_1 = arith.constant 0 : index
    %c0_2 = arith.constant 0 : index
    %3 = vector.load %arg1[%c0_1, %c0_2] : memref<8x128xf32, #tpu.memory_space<vmem>>, vector<8x128xf32>
    %4 = arith.addf %2, %3 : vector<8x128xf32>
    %c0_3 = arith.constant 0 : index
    %c0_4 = arith.constant 0 : index
    %5 = vector.load %arg2[%c0_3, %c0_4] : memref<8x128xf32, #tpu.memory_space<vmem>>, vector<8x128xf32>
    tpu.vector_store %arg2[%c0_3, %c0_4], %4 {strides = array<i32>} : memref<8x128xf32, #tpu.memory_space<vmem>>, vector<8x128xf32>,
    return
  }
}

</mosaic_0001>

<llo_original>
// kernel: tpu_custom_call.1
$region0: #{tpu_custom_call.1}
  #allocation0 [shape = 'u32[]', space=smem, size = 0x4, offset = 0x4, fixed_abs, tag = 'smem constant byte address 0x4 - core index']
  #allocation1 [shape = 'u32[144,128]{1,0:T(1,128)}', space=vmem, size = 0x12000, scoped, tag = 'internal scratch']
  %s0 = inlined_call_operand.hbm [shape: f32[8,128], index: 0, kind: input, shape index: {}, may-alias: {0,2}]
  %s1 = inlined_call_operand.vmem [shape: f32[8,128], index: 1, kind: input, shape index: {}]
  %s2 = inlined_call_operand.hbm [shape: f32[8,128], index: 2, kind: output, shape index: {}, may-alias: {0,2}]
  %s3 = sld [smem:[#allocation0]]
  $region22: #{tpu_custom_call.1} parent=0
    _
  %s5 = ssub.s32 1, %s3
  %s6 = scalar_select 0, %s5, %s3
  $region1: #{tpu_custom_call.1} parent=0
    #allocation2 [shape = 'u8[4096]{0}', space=vmem, size = 0x1000, scoped, tag = 'input window, operand 0, single buffered']
    #allocation3 [shape = 's32[1]{0}', space=sflag, size = 0x4, scoped, tag = 'scoped memory for tpu_custom_call.1']
    #allocation4 [shape = 's32[1]{0}', space=sflag, size = 0x4, scoped, tag = 'scoped memory for tpu_custom_call.1']
    #allocation5 [shape = 'u8[4096]{0}', space=vmem, size = 0x1000, scoped, tag = 'output window, operand 0, single buffered']
    %7 = vsyncpa [#allocation3], 0
    %8 = vsyncpa [#allocation4], 0
    // Predicated region
    $region2: #{tpu_custom_call.1} parent=1 // pred_check
      _
    $region3: #{tpu_custom_call.1} parent=1 // pred_check_branch
      %10 = sbr.rel (0) target = $region5
    $region4: #{tpu_custom_call.1} parent=1 // pred_region
      %s12 = ssub.s32 128, 128
      %13 = vsyncadd [#allocation3], %s12
      %s15 = sshll.u32 [#allocation2], 4
      %s16 = int_to_ptr.vmem [resolvable:$true] %s15
      %18 = dma.hbm_to_vmem [thread:$0]  %s0, 128, %s16, [#allocation3]
    $region5: #{tpu_custom_call.1} parent=1 // pred_fallthru
      _
    // Predicated region
    $region6: #{tpu_custom_call.1} parent=1 // pred_check
      _
    $region7: #{tpu_custom_call.1} parent=1 // pred_check_branch
      %20 = sbr.rel (0) target = $region9
    $region8: #{tpu_custom_call.1} parent=1 // pred_region
      _
    $region9: #{tpu_custom_call.1} parent=1 // pred_fallthru
      _
    // Predicated region
    $region10: #{tpu_custom_call.1} parent=1 // pred_check
      _
    $region11: #{tpu_custom_call.1} parent=1 // pred_check_branch
      %22 = sbr.rel (0) target = $region13
    $region12: #{tpu_custom_call.1} parent=1 // pred_region
      %23 = dma.done [#allocation3], 128
    $region13: #{tpu_custom_call.1} parent=1 // pred_fallthru
      _
    %v24 = vld [vmem:[#allocation2] sm:$0xff]
    %v25 = vmul.f32 %v24, 5.656854
    %v26 = vld [vmem:[%s1] sm:$0xff]
    %v27 = vadd.f32 %v25, %v26
    %28 = vst [vmem:[#allocation5] sm:$0xff] %v27
    // Predicated region
    $region14: #{tpu_custom_call.1} parent=1 // pred_check
      _
    $region15: #{tpu_custom_call.1} parent=1 // pred_check_branch
      %30 = sbr.rel (0) target = $region17
    $region16: #{tpu_custom_call.1} parent=1 // pred_region
      %s32 = ssub.s32 128, 128
      %33 = vsyncadd [#allocation4], %s32
      %s35 = sshll.u32 [#allocation5], 4
      %s36 = int_to_ptr.vmem [resolvable:$true] %s35
      %38 = dma.vmem_to_hbm [thread:$0]  %s36, 128, %s2, [#allocation4]
    $region17: #{tpu_custom_call.1} parent=1 // pred_fallthru
      _
    // Predicated region
    $region18: #{tpu_custom_call.1} parent=1 // pred_check
      _
    $region19: #{tpu_custom_call.1} parent=1 // pred_check_branch
      %40 = sbr.rel (0) target = $region21
    $region20: #{tpu_custom_call.1} parent=1 // pred_region
      %41 = dma.done [#allocation4], 128
    $region21: #{tpu_custom_call.1} parent=1 // pred_fallthru
      _
    %42 = vsyncpa [#allocation3], 1
    %43 = vsyncpa [#allocation4], 1

</llo_original>
